<compile_context>
chip_gen: v7x
topology: tpu7x:2x2x1
jax: 0.10.0
libtpu: 0.0.40
codegen_flags: <defaults>
</compile_context>

<pallas_src>
import jax
import jax.numpy as jnp
import numpy as np
from jax.experimental import pallas as pl
from jax.experimental.pallas import tpu as pltpu

LRELU_SLOPE = 0.1
KERNEL_SIZE = 3
DILATIONS = (1, 3)
# get_padding(k, d) = (k*d - d) // 2  -> equals d for k=3
PADS = tuple((KERNEL_SIZE * d - d) // 2 for d in DILATIONS)   # (1, 3)
MAX_PAD = max(PADS)                                           # 3
HALO = sum(PADS)                                              # 4 = receptive half-width


def _round_up(v: int, m: int) -> int:
    return (v + m - 1) // m * m


def resblock_kernel(xw_ref, mw_ref, w_ref, b_ref, o_ref, s_ref):
    # xw_ref: (1, 1, Cp, W)   halo'd input window, f32
    # mw_ref: (1, 1, 1,  W)   halo'd mask window, f32
    # w_ref : (L, Cp, K*Cp)   fused per-tap weights, bf16
    # b_ref : (L, Cp, 1)      bias, f32
    # o_ref : (1, Cp, tile)   output = center columns of the window
    # s_ref : (Cp, W + 2*MAX_PAD) f32 staging scratch.  NEVER initialized: its
    #         border columns only affect window columns outside the output
    #         tile (absorbed by the halo), so garbage there is harmless.
    W = xw_ref.shape[-1]
    tile = o_ref.shape[-1]

    x = xw_ref[0, 0].astype(jnp.float32)      # (Cp, W)
    m = mw_ref[0, 0].astype(jnp.float32)      # (1,  W), broadcasts over Cp

    for l, d in enumerate(DILATIONS):         # unrolled at trace time
        # elementwise stays f32 (v5e has no bf16 VPU)
        xt = jnp.where(x >= 0, x, LRELU_SLOPE * x) * m          # (Cp, W)
        s_ref[:, MAX_PAD:MAX_PAD + W] = xt
        # 3 shifted taps stacked along the contraction axis -> one matmul,
        # bf16 operands, f32 accumulate.
        taps = jnp.concatenate(
            [s_ref[:, MAX_PAD + (k - 1) * d: MAX_PAD + (k - 1) * d + W]
             for k in range(KERNEL_SIZE)],
            axis=0).astype(jnp.bfloat16)                        # (K*Cp, W)
        conv = jnp.dot(w_ref[l], taps, preferred_element_type=jnp.float32)
        x = conv + b_ref[l] + x                                 # bias + residual

    # Final mask; route through the scratch so the lane-offset center
    # extraction is a ref slice, then do one lane-dense store.
    s_ref[:, MAX_PAD:MAX_PAD + W] = x * m
    o_ref[0] = s_ref[:, MAX_PAD + HALO: MAX_PAD + HALO + tile].astype(o_ref.dtype)


def resblock_pallas(x, x_mask, w, b, *, tile_t=512):
    """ResBlock forward.

    x:      (B, C, T) activations.
    x_mask: (B, 1, T) mask (pass ones for the x_mask=None case).
    w:      (2, K, C, C) conv weights, w[l, k] == torch_weight_l[:, :, k]
            (weight_norm folded into the effective weight).
    b:      (2, C, 1) conv biases.
    """
    B, C, T = x.shape
    L, K = w.shape[0], w.shape[1]
    assert K == KERNEL_SIZE and L == len(DILATIONS)
    assert tile_t % 128 == 0

    out_dtype = x.dtype
    C_pad = _round_up(C, 16)                  # bf16 sublane packing
    tile = min(tile_t, _round_up(T, 128))     # lane-dense output blocks
    T_pad = _round_up(T, tile)
    n_t = T_pad // tile
    W = tile + 2 * HALO

    f32 = jnp.float32
    # Pad channels / time; HALO zeros (the convs' virtual zero padding) on
    # both ends of the time axis.
    x_p = jnp.pad(x.astype(f32), ((0, 0), (0, C_pad - C), (HALO, T_pad - T + HALO)))
    m_p = jnp.pad(x_mask.astype(f32), ((0, 0), (0, 0), (HALO, T_pad - T + HALO)))

    # Overlapping halo'd windows: (B, n_t, C_pad, W) / (B, n_t, 1, W).
    x_win = jnp.stack([x_p[:, :, t * tile: t * tile + W] for t in range(n_t)], axis=1)
    m_win = jnp.stack([m_p[:, :, t * tile: t * tile + W] for t in range(n_t)], axis=1)

    # Fuse the K taps along the contraction axis: (L, C_pad, K*C_pad), bf16.
    w_p = jnp.pad(w.astype(f32), ((0, 0), (0, 0), (0, C_pad - C), (0, C_pad - C)))
    w_fused = jnp.transpose(w_p, (0, 2, 1, 3)).reshape(L, C_pad, K * C_pad)
    w_fused = w_fused.astype(jnp.bfloat16)
    b_p = jnp.pad(b.astype(f32), ((0, 0), (0, C_pad - C), (0, 0)))

    flops = 2 * L * K * C_pad * C_pad * W * B * n_t
    bytes_accessed = ((x_win.size + m_win.size + b_p.size) * 4 + w_fused.size * 2
                      + B * C_pad * T_pad * jnp.dtype(out_dtype).itemsize)

    out = pl.pallas_call(
        resblock_kernel,
        out_shape=jax.ShapeDtypeStruct((B, C_pad, T_pad), out_dtype),
        grid_spec=pltpu.PrefetchScalarGridSpec(
            num_scalar_prefetch=0,
            grid=(B, n_t),
            in_specs=[
                pl.BlockSpec((1, 1, C_pad, W), lambda bb, tt: (bb, tt, 0, 0)),
                pl.BlockSpec((1, 1, 1, W), lambda bb, tt: (bb, tt, 0, 0)),
                pl.BlockSpec((L, C_pad, K * C_pad), lambda bb, tt: (0, 0, 0)),
                pl.BlockSpec((L, C_pad, 1), lambda bb, tt: (0, 0, 0)),
            ],
            out_specs=pl.BlockSpec((1, C_pad, tile), lambda bb, tt: (bb, 0, tt)),
            scratch_shapes=[pltpu.VMEM((C_pad, W + 2 * MAX_PAD), jnp.float32)],
        ),
        compiler_params=pltpu.CompilerParams(
            dimension_semantics=("parallel", "parallel")),
        cost_estimate=pl.CostEstimate(flops=int(flops), transcendentals=0,
                                      bytes_accessed=int(bytes_accessed)),
    )(x_win, m_win, w_fused, b_p)

    return out[:, :C, :T]


def resblock_ref(x, x_mask, w, b):
    """Pure-JAX f32 reference matching the PyTorch forward."""
    B, C, T = x.shape
    for l, d in enumerate(DILATIONS):
        p = PADS[l]
        xt = jnp.where(x >= 0, x, LRELU_SLOPE * x) * x_mask
        xt_pad = jnp.pad(xt, ((0, 0), (0, 0), (p, p)))
        acc = jnp.zeros_like(x)
        for k in range(KERNEL_SIZE):
            acc = acc + jnp.einsum(
                "oi,bit->bot", w[l, k], xt_pad[:, :, k * d:k * d + T])
        acc = acc + b[l][None, :, :]
        x = acc + x
    return x * x_mask


if __name__ == "__main__":
    # Small but representative: exercises C padding (8 -> 16), T padding
    # (300 -> 384) and the multi-tile path (3 time tiles of 128 + halo).
    B, C, T = 2, 8, 300

    key = jax.random.PRNGKey(0)
    kx, kw, kb = jax.random.split(key, 3)

    x = jax.random.normal(kx, (B, C, T), jnp.float32)
    # mask: ones with the tail zeroed (exercises the x_mask branch)
    t_idx = jnp.arange(T)[None, None, :]
    x_mask = (t_idx < (3 * T // 4)).astype(jnp.float32) * jnp.ones((B, 1, 1), jnp.float32)

    # init_weights: normal(mean=0, std=0.01); weight_norm is identity at init.
    w = 0.01 * jax.random.normal(kw, (2, KERNEL_SIZE, C, C), jnp.float32)
    b = 0.01 * jax.random.normal(kb, (2, C, 1), jnp.float32)

    out = resblock_pallas(x, x_mask, w, b, tile_t=128)
    out = jax.block_until_ready(out)

    ref = resblock_ref(x, x_mask, w, b)
    # bf16 MXU operands (f32 accumulate) -> slightly looser tolerance than f32.
    np.testing.assert_allclose(np.asarray(out), np.asarray(ref),
                               rtol=2e-2, atol=5e-3)
    print("KERNEL_OK")
</pallas_src>

<mosaic_0001>
module attributes {stable_mosaic.version = 11 : i64} {
  func.func @resblock_kernel(%arg0: i32, %arg1: i32, %arg2: memref<1x1x16x136xf32, #tpu.memory_space<vmem>>, %arg3: memref<1x1x1x136xf32, #tpu.memory_space<vmem>>, %arg4: memref<2x16x48xbf16, #tpu.memory_space<vmem>>, %arg5: memref<2x16x1xf32, #tpu.memory_space<vmem>>, %arg6: memref<1x16x128xf32, #tpu.memory_space<vmem>>, %arg7: memref<16x142xf32, #tpu.memory_space<vmem>>) attributes {dimension_semantics = [#tpu.dimension_semantics<parallel>, #tpu.dimension_semantics<parallel>], iteration_bounds = array<i64: 2, 3>, scalar_prefetch = 0 : i64, scratch_operands = 1 : i64, tpu.core_type = #tpu.core_type<tc>, window_params = [{transform_indices = @transform_0, window_bounds = array<i64: 1, 1, 16, 136>}, {transform_indices = @transform_1, window_bounds = array<i64: 1, 1, 1, 136>}, {pipeline_mode = #tpu.pipeline_mode<synchronous>, transform_indices = @transform_2, window_bounds = array<i64: 2, 16, 48>}, {pipeline_mode = #tpu.pipeline_mode<synchronous>, transform_indices = @transform_3, window_bounds = array<i64: 2, 16, 1>}, {transform_indices = @transform_4, window_bounds = array<i64: 1, 16, 128>}]} {
    %c0 = arith.constant 0 : index
    %c0_0 = arith.constant 0 : index
    %c0_1 = arith.constant 0 : index
    %c0_2 = arith.constant 0 : index
    %0 = vector.load %arg2[%c0, %c0_0, %c0_1, %c0_2] : memref<1x1x16x136xf32, #tpu.memory_space<vmem>>, vector<1x1x16x136xf32>
    %1 = vector.shape_cast %0 : vector<1x1x16x136xf32> to vector<16x136xf32>
    %c0_3 = arith.constant 0 : index
    %c0_4 = arith.constant 0 : index
    %c0_5 = arith.constant 0 : index
    %c0_6 = arith.constant 0 : index
    %2 = vector.load %arg3[%c0_3, %c0_4, %c0_5, %c0_6] : memref<1x1x1x136xf32, #tpu.memory_space<vmem>>, vector<1x1x1x136xf32>
    %3 = vector.shape_cast %2 : vector<1x1x1x136xf32> to vector<1x136xf32>
    %cst = arith.constant 0.000000e+00 : f32
    %4 = vector.broadcast %cst : f32 to vector<16x136xf32>
    %5 = arith.cmpf oge, %1, %4 : vector<16x136xf32>
    %cst_7 = arith.constant 1.000000e-01 : f32
    %6 = vector.broadcast %cst_7 : f32 to vector<16x136xf32>
    %7 = arith.mulf %6, %1 : vector<16x136xf32>
    %8 = arith.select %5, %1, %7 : vector<16x136xi1>, vector<16x136xf32>
    %9 = vector.broadcast %3 : vector<1x136xf32> to vector<16x136xf32>
    %10 = arith.mulf %8, %9 : vector<16x136xf32>
    %c0_8 = arith.constant 0 : index
    %c3 = arith.constant 3 : index
    %11 = vector.load %arg7[%c0_8, %c3] : memref<16x142xf32, #tpu.memory_space<vmem>>, vector<16x136xf32>
    tpu.vector_store %arg7[%c0_8, %c3], %10 {strides = array<i32>} : memref<16x142xf32, #tpu.memory_space<vmem>>, vector<16x136xf32>,
    %c0_9 = arith.constant 0 : index
    %c2 = arith.constant 2 : index
    %12 = vector.load %arg7[%c0_9, %c2] : memref<16x142xf32, #tpu.memory_space<vmem>>, vector<16x136xf32>
    %c0_10 = arith.constant 0 : index
    %c3_11 = arith.constant 3 : index
    %13 = vector.load %arg7[%c0_10, %c3_11] : memref<16x142xf32, #tpu.memory_space<vmem>>, vector<16x136xf32>
    %c0_12 = arith.constant 0 : index
    %c4 = arith.constant 4 : index
    %14 = vector.load %arg7[%c0_12, %c4] : memref<16x142xf32, #tpu.memory_space<vmem>>, vector<16x136xf32>
    %15 = tpu.concatenate %12, %13, %14 in 0 : vector<16x136xf32>, vector<16x136xf32>, vector<16x136xf32> -> vector<48x136xf32>
    %16 = arith.truncf %15 : vector<48x136xf32> to vector<48x136xbf16>
    %c0_13 = arith.constant 0 : index
    %c0_14 = arith.constant 0 : index
    %c0_15 = arith.constant 0 : index
    %17 = vector.load %arg4[%c0_13, %c0_14, %c0_15] : memref<2x16x48xbf16, #tpu.memory_space<vmem>>, vector<1x16x48xbf16>
    %18 = vector.shape_cast %17 : vector<1x16x48xbf16> to vector<16x48xbf16>
    %cst_16 = arith.constant dense<0.000000e+00> : vector<16x136xf32>
    %19 = tpu.matmul %18, %16, %cst_16 {dimension_numbers = #tpu.dot_dimension_numbers<[1], [0], [0], [1], [0, 0, 1, 1], [], []>} : vector<16x48xbf16>, vector<48x136xbf16>, vector<16x136xf32> -> vector<16x136xf32>
    %c0_17 = arith.constant 0 : index
    %c0_18 = arith.constant 0 : index
    %c0_19 = arith.constant 0 : index
    %20 = vector.load %arg5[%c0_17, %c0_18, %c0_19] : memref<2x16x1xf32, #tpu.memory_space<vmem>>, vector<1x16x1xf32>
    %21 = vector.shape_cast %20 : vector<1x16x1xf32> to vector<16x1xf32>
    %22 = vector.broadcast %21 : vector<16x1xf32> to vector<16x136xf32>
    %23 = arith.addf %19, %22 : vector<16x136xf32>
    %24 = arith.addf %23, %1 : vector<16x136xf32>
    %cst_20 = arith.constant 0.000000e+00 : f32
    %25 = vector.broadcast %cst_20 : f32 to vector<16x136xf32>
    %26 = arith.cmpf oge, %24, %25 : vector<16x136xf32>
    %cst_21 = arith.constant 1.000000e-01 : f32
    %27 = vector.broadcast %cst_21 : f32 to vector<16x136xf32>
    %28 = arith.mulf %27, %24 : vector<16x136xf32>
    %29 = arith.select %26, %24, %28 : vector<16x136xi1>, vector<16x136xf32>
    %30 = vector.broadcast %3 : vector<1x136xf32> to vector<16x136xf32>
    %31 = arith.mulf %29, %30 : vector<16x136xf32>
    %c0_22 = arith.constant 0 : index
    %c3_23 = arith.constant 3 : index
    %32 = vector.load %arg7[%c0_22, %c3_23] : memref<16x142xf32, #tpu.memory_space<vmem>>, vector<16x136xf32>
    tpu.vector_store %arg7[%c0_22, %c3_23], %31 {strides = array<i32>} : memref<16x142xf32, #tpu.memory_space<vmem>>, vector<16x136xf32>,
    %c0_24 = arith.constant 0 : index
    %c0_25 = arith.constant 0 : index
    %33 = vector.load %arg7[%c0_24, %c0_25] : memref<16x142xf32, #tpu.memory_space<vmem>>, vector<16x136xf32>
    %c0_26 = arith.constant 0 : index
    %c3_27 = arith.constant 3 : index
    %34 = vector.load %arg7[%c0_26, %c3_27] : memref<16x142xf32, #tpu.memory_space<vmem>>, vector<16x136xf32>
    %c0_28 = arith.constant 0 : index
    %c6 = arith.constant 6 : index
    %35 = vector.load %arg7[%c0_28, %c6] : memref<16x142xf32, #tpu.memory_space<vmem>>, vector<16x136xf32>
    %36 = tpu.concatenate %33, %34, %35 in 0 : vector<16x136xf32>, vector<16x136xf32>, vector<16x136xf32> -> vector<48x136xf32>
    %37 = arith.truncf %36 : vector<48x136xf32> to vector<48x136xbf16>
    %c1 = arith.constant 1 : index
    %c0_29 = arith.constant 0 : index
    %c0_30 = arith.constant 0 : index
    %38 = vector.load %arg4[%c1, %c0_29, %c0_30] : memref<2x16x48xbf16, #tpu.memory_space<vmem>>, vector<1x16x48xbf16>
    %39 = vector.shape_cast %38 : vector<1x16x48xbf16> to vector<16x48xbf16>
    %cst_31 = arith.constant dense<0.000000e+00> : vector<16x136xf32>
    %40 = tpu.matmul %39, %37, %cst_31 {dimension_numbers = #tpu.dot_dimension_numbers<[1], [0], [0], [1], [0, 0, 1, 1], [], []>} : vector<16x48xbf16>, vector<48x136xbf16>, vector<16x136xf32> -> vector<16x136xf32>
    %c1_32 = arith.constant 1 : index
    %c0_33 = arith.constant 0 : index
    %c0_34 = arith.constant 0 : index
    %41 = vector.load %arg5[%c1_32, %c0_33, %c0_34] : memref<2x16x1xf32, #tpu.memory_space<vmem>>, vector<1x16x1xf32>
    %42 = vector.shape_cast %41 : vector<1x16x1xf32> to vector<16x1xf32>
    %43 = vector.broadcast %42 : vector<16x1xf32> to vector<16x136xf32>
    %44 = arith.addf %40, %43 : vector<16x136xf32>
    %45 = arith.addf %44, %24 : vector<16x136xf32>
    %46 = vector.broadcast %3 : vector<1x136xf32> to vector<16x136xf32>
    %47 = arith.mulf %45, %46 : vector<16x136xf32>
    %c0_35 = arith.constant 0 : index
    %c3_36 = arith.constant 3 : index
    %48 = vector.load %arg7[%c0_35, %c3_36] : memref<16x142xf32, #tpu.memory_space<vmem>>, vector<16x136xf32>
    tpu.vector_store %arg7[%c0_35, %c3_36], %47 {strides = array<i32>} : memref<16x142xf32, #tpu.memory_space<vmem>>, vector<16x136xf32>,
    %c0_37 = arith.constant 0 : index
    %c7 = arith.constant 7 : index
    %49 = vector.load %arg7[%c0_37, %c7] : memref<16x142xf32, #tpu.memory_space<vmem>>, vector<16x128xf32>
    %c0_38 = arith.constant 0 : index
    %c0_39 = arith.constant 0 : index
    %c0_40 = arith.constant 0 : index
    %50 = vector.load %arg6[%c0_38, %c0_39, %c0_40] : memref<1x16x128xf32, #tpu.memory_space<vmem>>, vector<1x16x128xf32>
    %51 = vector.shape_cast %50 : vector<1x16x128xf32> to vector<16x128xf32>
    %52 = vector.shape_cast %49 : vector<16x128xf32> to vector<1x16x128xf32>
    tpu.vector_store %arg6[%c0_38, %c0_39, %c0_40], %52 {strides = array<i32>} : memref<1x16x128xf32, #tpu.memory_space<vmem>>, vector<1x16x128xf32>,
    return
  }
  func.func @transform_0(%arg0: i32, %arg1: i32) -> (i32, i32, i32, i32) {
    %c0_i32 = arith.constant 0 : i32
    %c0_i32_0 = arith.constant 0 : i32
    %c0_i32_1 = arith.constant 0 : i32
    return %arg0, %arg1, %c0_i32, %c0_i32_0 : i32, i32, i32, i32
  }
  func.func @transform_1(%arg0: i32, %arg1: i32) -> (i32, i32, i32, i32) {
    %c0_i32 = arith.constant 0 : i32
    %c0_i32_0 = arith.constant 0 : i32
    %c0_i32_1 = arith.constant 0 : i32
    return %arg0, %arg1, %c0_i32, %c0_i32_0 : i32, i32, i32, i32
  }
  func.func @transform_2(%arg0: i32, %arg1: i32) -> (i32, i32, i32) {
    %c0_i32 = arith.constant 0 : i32
    %c0_i32_0 = arith.constant 0 : i32
    %c0_i32_1 = arith.constant 0 : i32
    %c0_i32_2 = arith.constant 0 : i32
    return %c0_i32, %c0_i32_0, %c0_i32_1 : i32, i32, i32
  }
  func.func @transform_3(%arg0: i32, %arg1: i32) -> (i32, i32, i32) {
    %c0_i32 = arith.constant 0 : i32
    %c0_i32_0 = arith.constant 0 : i32
    %c0_i32_1 = arith.constant 0 : i32
    %c0_i32_2 = arith.constant 0 : i32
    return %c0_i32, %c0_i32_0, %c0_i32_1 : i32, i32, i32
  }
  func.func @transform_4(%arg0: i32, %arg1: i32) -> (i32, i32, i32) {
    %c0_i32 = arith.constant 0 : i32
    %c0_i32_0 = arith.constant 0 : i32
    return %arg0, %c0_i32, %arg1 : i32, i32, i32
  }
}

</mosaic_0001>

<llo_original>
// kernel: tpu_custom_call.1
$region0: #{tpu_custom_call.1}
  #allocation0 [shape = 'u32[]', space=smem, size = 0x4, offset = 0x4, fixed_abs, tag = 'smem constant byte address 0x4 - core index']
  #allocation1 [shape = 'u32[144,128]{1,0:T(1,128)}', space=vmem, size = 0x12000, scoped, tag = 'internal scratch']
  #allocation2 [shape = 'f32[16,142]{1,0:T(8,128)}', space=vmem, size = 0x4000, scoped, tag = 'scratch operand']
  %s0 = inlined_call_operand.hbm [shape: f32[2,3,16,136], index: 0, kind: input, shape index: {}]
  %s1 = inlined_call_operand.vmem [shape: f32[2,3,1,136], index: 1, kind: input, shape index: {}]
  %s2 = inlined_call_operand.vmem [shape: bf16[2,16,48], index: 2, kind: input, shape index: {}]
  %s3 = inlined_call_operand.vmem [shape: f32[2,16,1], index: 3, kind: input, shape index: {}]
  %s4 = inlined_call_operand.hbm [shape: f32[2,16,384], index: 4, kind: output, shape index: {}]
  %s5 = sld [smem:[#allocation0]]
  $region53: #{tpu_custom_call.1} parent=0
    _
  %s7 = ssub.s32 1, %s5
  %s8 = scalar_select 0, %s7, %s5
  $region1: #{tpu_custom_call.1} parent=0
    #allocation3 [shape = 'u8[32768]{0}', space=vmem, size = 0x8000, scoped, tag = 'input window, operand 0']
    #allocation4 [shape = 's32[2]{0}', space=sflag, size = 0x8, scoped, tag = 'scoped memory for tpu_custom_call.1']
    #allocation5 [shape = 's32[2]{0}', space=sflag, size = 0x8, scoped, tag = 'scoped memory for tpu_custom_call.1']
    #allocation6 [shape = 'u8[16384]{0}', space=vmem, size = 0x4000, scoped, tag = 'output window, operand 0']
    %9 = vsyncpa [#allocation4], 0
    %s10 = scalar_lea.sflag [#allocation4], 1
    %11 = vsyncpa %s10, 0
    %12 = vsyncpa [#allocation5], 0
    %s13 = scalar_lea.sflag [#allocation5], 1
    %14 = vsyncpa %s13, 0
    loop: start=0, step=1, limit=8
    $region2: #{tpu_custom_call.1} parent=1 // loop_pre_header
      _
    $region3: #{tpu_custom_call.1} parent=1 // loop_header
      %s16 = sphi 0, %s20
      %p17 = scmp.ge.s32.totalorder %s16, 8
      %s23 = sphi 0, %s35
      %s24 = sphi 0, %s31
      %s25 = sphi 0, %s23
      %s26 = sphi 0, %s24
      %s27 = sphi 0, %s25
      %s28 = sphi 0, %s26
      %s40 = sphi 0, %s42
      %s43 = sphi 0, %s40
      %s44 = sphi 0, %s43
      %s60 = sphi 0, %s44
      %s68 = sphi 0, %s70
      %s71 = sphi 0, %s68
      %s72 = sphi 0, %s71
      %s88 = sphi 0, %s72
      %s92 = sphi 0, %s92
      %s94 = sphi 0, %s92
      %s95 = sphi 0, %s94
      %s109 = sphi 0, %s95
      %s113 = sphi 0, %s113
      %s115 = sphi 0, %s113
      %s116 = sphi 0, %s115
      %s130 = sphi 0, %s116
      %s138 = sphi 0, %s140
      %s141 = sphi 0, %s138
      %s142 = sphi 0, %s141
      %s158 = sphi 0, %s142
    $region4: #{tpu_custom_call.1} parent=1 // loop_header_branch
      %19 = sbr.rel (%p17) target = $region8
    $region5: #{tpu_custom_call.1} parent=1 // loop_body
      %s21 = ssub.s32 %s16, 1
      %s22 = ssub.s32 %s16, 2
      %s29 = sadd.s32 1, %s24
      %p30 = scmp.ge.s32.totalorder %s29, 3
      %s31 = scalar_select %p30, 0, %s29
      %s32 = sadd.s32 1, %s23
      %s33 = scalar_select %p30, %s32, %s23
      %p34 = scmp.ge.s32.totalorder %s33, 2
      %s35 = scalar_select %p34, 0, %s33
      %s36 = ssub.s32 %s23, %s35
      %s37 = ssub.s32 %s24, %s31
      %s38 = sor.u32 %s36, %s37
      %p39 = scmp.eq.s32.totalorder %s38, 0
      %s41 = sadd.s32 %s40, 1
      %s42 = scalar_select %p39, %s40, %s41
      %p45 = pneg %p39
      %p46 = scmp.eq.s32.totalorder %s16, 5
      %p47 = por %p45, %p46
      %p48 = scmp.ne.s32.totalorder %s40, %s43
      %p49 = scmp.eq.s32.totalorder %s16, 0
      %p50 = por %p48, %p49
      %p51 = scmp.ne.s32.totalorder %s40, %s43
      %p52 = scmp.eq.s32.totalorder %s21, 5
      %p53 = por %p51, %p52
      %p54 = scmp.ne.s32.totalorder %s43, %s44
      %p55 = scmp.eq.s32.totalorder %s21, 0
      %p56 = por %p54, %p55
      %p57 = scmp.ne.s32.totalorder %s43, %s44
      %p58 = scmp.eq.s32.totalorder %s22, 5
      %p59 = por %p57, %p58
      %p61 = scmp.ne.s32.totalorder %s44, %s60
      %p62 = scmp.eq.s32.totalorder %s22, 0
      %p63 = por %p61, %p62
      %s64 = ssub.s32 %s23, %s35
      %s65 = ssub.s32 %s24, %s31
      %s66 = sor.u32 %s64, %s65
      %p67 = scmp.eq.s32.totalorder %s66, 0
      %s69 = sadd.s32 %s68, 1
      %s70 = scalar_select %p67, %s68, %s69
      %p73 = pneg %p67
      %p74 = scmp.eq.s32.totalorder %s16, 5
      %p75 = por %p73, %p74
      %p76 = scmp.ne.s32.totalorder %s68, %s71
      %p77 = scmp.eq.s32.totalorder %s16, 0
      %p78 = por %p76, %p77
      %p79 = scmp.ne.s32.totalorder %s68, %s71
      %p80 = scmp.eq.s32.totalorder %s21, 5
      %p81 = por %p79, %p80
      %p82 = scmp.ne.s32.totalorder %s71, %s72
      %p83 = scmp.eq.s32.totalorder %s21, 0
      %p84 = por %p82, %p83
      %p85 = scmp.ne.s32.totalorder %s71, %s72
      %p86 = scmp.eq.s32.totalorder %s22, 5
      %p87 = por %p85, %p86
      %p89 = scmp.ne.s32.totalorder %s72, %s88
      %p90 = scmp.eq.s32.totalorder %s22, 0
      %p91 = por %p89, %p90
      %s93 = sadd.s32 %s92, 1
      %p96 = scmp.eq.s32.totalorder %s16, 5
      %p97 = scmp.ne.s32.totalorder %s92, %s94
      %p98 = scmp.eq.s32.totalorder %s16, 0
      %p99 = por %p97, %p98
      %p100 = scmp.ne.s32.totalorder %s92, %s94
      %p101 = scmp.eq.s32.totalorder %s21, 5
      %p102 = por %p100, %p101
      %p103 = scmp.ne.s32.totalorder %s94, %s95
      %p104 = scmp.eq.s32.totalorder %s21, 0
      %p105 = por %p103, %p104
      %p106 = scmp.ne.s32.totalorder %s94, %s95
      %p107 = scmp.eq.s32.totalorder %s22, 5
      %p108 = por %p106, %p107
      %p110 = scmp.ne.s32.totalorder %s95, %s109
      %p111 = scmp.eq.s32.totalorder %s22, 0
      %p112 = por %p110, %p111
      %s114 = sadd.s32 %s113, 1
      %p117 = scmp.eq.s32.totalorder %s16, 5
      %p118 = scmp.ne.s32.totalorder %s113, %s115
      %p119 = scmp.eq.s32.totalorder %s16, 0
      %p120 = por %p118, %p119
      %p121 = scmp.ne.s32.totalorder %s113, %s115
      %p122 = scmp.eq.s32.totalorder %s21, 5
      %p123 = por %p121, %p122
      %p124 = scmp.ne.s32.totalorder %s115, %s116
      %p125 = scmp.eq.s32.totalorder %s21, 0
      %p126 = por %p124, %p125
      %p127 = scmp.ne.s32.totalorder %s115, %s116
      %p128 = scmp.eq.s32.totalorder %s22, 5
      %p129 = por %p127, %p128
      %p131 = scmp.ne.s32.totalorder %s116, %s130
      %p132 = scmp.eq.s32.totalorder %s22, 0
      %p133 = por %p131, %p132
      %s134 = ssub.s32 %s23, %s35
      %s135 = ssub.s32 %s24, %s31
      %s136 = sor.u32 %s134, %s135
      %p137 = scmp.eq.s32.totalorder %s136, 0
      %s139 = sadd.s32 %s138, 1
      %s140 = scalar_select %p137, %s138, %s139
      %p143 = pneg %p137
      %p144 = scmp.eq.s32.totalorder %s16, 5
      %p145 = por %p143, %p144
      %p146 = scmp.ne.s32.totalorder %s138, %s141
      %p147 = scmp.eq.s32.totalorder %s16, 0
      %p148 = por %p146, %p147
      %p149 = scmp.ne.s32.totalorder %s138, %s141
      %p150 = scmp.eq.s32.totalorder %s21, 5
      %p151 = por %p149, %p150
      %p152 = scmp.ne.s32.totalorder %s141, %s142
      %p153 = scmp.eq.s32.totalorder %s21, 0
      %p154 = por %p152, %p153
      %p155 = scmp.ne.s32.totalorder %s141, %s142
      %p156 = scmp.eq.s32.totalorder %s22, 5
      %p157 = por %p155, %p156
      %p159 = scmp.ne.s32.totalorder %s142, %s158
      %p160 = scmp.eq.s32.totalorder %s22, 0
      %p161 = por %p159, %p160
      %p162 = scmp.le.s32.totalorder 1, %s16
      %p163 = scmp.lt.s32.totalorder %s16, 7
      %p164 = pnand %p162, %p163
      %p165 = pneg %p164
      // Predicated region
      $region9: #{tpu_custom_call.1} parent=5 // pred_check
        _
      $region10: #{tpu_custom_call.1} parent=5 // pred_check_branch
        %167 = sbr.rel (%p164) target = $region12
      $region11: #{tpu_custom_call.1} parent=5 // pred_region
        %s168 = ssub.s32 %s16, 1
        // Predicated region
        $region13: #{tpu_custom_call.1} parent=11 // pred_check
          %p169 = pneg %p105
        $region14: #{tpu_custom_call.1} parent=11 // pred_check_branch
          %171 = sbr.rel (%p169) target = $region16
        $region15: #{tpu_custom_call.1} parent=11 // pred_region
          _
        $region16: #{tpu_custom_call.1} parent=11 // pred_fallthru
          _
        // Predicated region
        $region17: #{tpu_custom_call.1} parent=11 // pred_check
          %p172 = pneg %p126
        $region18: #{tpu_custom_call.1} parent=11 // pred_check_branch
          %174 = sbr.rel (%p172) target = $region20
        $region19: #{tpu_custom_call.1} parent=11 // pred_region
          _
        $region20: #{tpu_custom_call.1} parent=11 // pred_fallthru
          _
      $region12: #{tpu_custom_call.1} parent=5 // pred_fallthru
        _
      %p175 = scmp.lt.s32.totalorder %s16, 6
      // Predicated region
      $region21: #{tpu_custom_call.1} parent=5 // pred_check
        %p176 = pneg %p175
      $region22: #{tpu_custom_call.1} parent=5 // pred_check_branch
        %178 = sbr.rel (%p176) target = $region24
      $region23: #{tpu_custom_call.1} parent=5 // pred_region
        // Predicated region
        $region25: #{tpu_custom_call.1} parent=23 // pred_check
          %p179 = pneg %p50
        $region26: #{tpu_custom_call.1} parent=23 // pred_check_branch
          %181 = sbr.rel (%p179) target = $region28
        $region27: #{tpu_custom_call.1} parent=23 // pred_region
          %s182 = sand.u32 %s40, 1
          %s183 = scalar_lea.sflag [#allocation4], %s182
          %s184 = sand.u32 %s40, 1
          %s185 = smul.addr %s184, 32
          %s186 = scalar_lea.vmem [#allocation3], %s185
          %s188 = ssub.s32 512, 512
          %189 = vsyncadd %s183, %s188
          %s190 = smul.addr %s24, 4
          %s191 = smul.addr %s23, 12
          %s192 = sadd.s32 %s190, %s191
          %s193 = smul.addr %s192, 128
          %s194 = scalar_lea.hbm %s0, %s193
          %s195 = sshll.u32 %s186, 4
          %s196 = int_to_ptr.vmem [resolvable:$true] %s195
          %201 = dma.hbm_to_vmem [thread:$0]  %s194, 512, %s196, %s183, 256, 256, 16
        $region28: #{tpu_custom_call.1} parent=23 // pred_fallthru
          _
        // Predicated region
        $region29: #{tpu_custom_call.1} parent=23 // pred_check
          %p202 = pneg %p78
        $region30: #{tpu_custom_call.1} parent=23 // pred_check_branch
          %204 = sbr.rel (%p202) target = $region32
        $region31: #{tpu_custom_call.1} parent=23 // pred_region
          %p205 = scmp.lt.s32.totalorder %s23, 1
          %s206 = scalar_select %p205, %s23, 1
          %p207 = scmp.lt.s32.totalorder %s24, 2
          %s208 = scalar_select %p207, %s24, 2
          %s209 = smul.addr %s208, 2
          %s210 = smul.addr %s206, 6
          %s211 = sadd.s32 %s209, %s210
          %s212 = scalar_lea.vmem %s1, %s211
        $region32: #{tpu_custom_call.1} parent=23 // pred_fallthru
          _
      $region24: #{tpu_custom_call.1} parent=5 // pred_fallthru
        _
      %p213 = scmp.le.s32.totalorder 1, %s16
      %p214 = scmp.lt.s32.totalorder %s16, 7
      %p215 = pnand %p213, %p214
      %p216 = pneg %p215
      // Predicated region
      $region33: #{tpu_custom_call.1} parent=5 // pred_check
        _
      $region34: #{tpu_custom_call.1} parent=5 // pred_check_branch
        %218 = sbr.rel (%p215) target = $region36
      $region35: #{tpu_custom_call.1} parent=5 // pred_region
        %s219 = ssub.s32 %s16, 1
        %s220 = sand.u32 %s43, 1
        %s221 = scalar_lea.sflag [#allocation4], %s220
        %s222 = sand.u32 %s43, 1
        %s223 = smul.addr %s222, 32
        %s224 = scalar_lea.vmem [#allocation3], %s223
        // Predicated region
        $region37: #{tpu_custom_call.1} parent=35 // pred_check
          %p225 = pneg %p56
        $region38: #{tpu_custom_call.1} parent=35 // pred_check_branch
          %227 = sbr.rel (%p225) target = $region40
        $region39: #{tpu_custom_call.1} parent=35 // pred_region
          %228 = dma.done %s221, 512
        $region40: #{tpu_custom_call.1} parent=35 // pred_fallthru
          _
        %s229 = sand.u32 %s43, 1
        %s230 = scalar_lea.sflag [#allocation4], %s229
        %s231 = sand.u32 %s43, 1
        %s232 = smul.addr %s231, 32
        %s233 = scalar_lea.vmem [#allocation3], %s232
        %p234 = pneg %p56
        %p235 = pneg %p53
        %p236 = scmp.lt.s32.totalorder %s25, 1
        %s237 = scalar_select %p236, %s25, 1
        %p238 = scmp.lt.s32.totalorder %s26, 2
        %s239 = scalar_select %p238, %s26, 2
        %s240 = smul.addr %s239, 2
        %s241 = smul.addr %s237, 6
        %s242 = sadd.s32 %s240, %s241
        %s243 = scalar_lea.vmem %s1, %s242
        %p244 = pneg %p84
        %p245 = pneg %p81
        %p246 = pneg %p105
        %p247 = pneg %p102
        %p248 = pneg %p126
        %p249 = pneg %p123
        %p250 = pneg %p154
        %p251 = pneg %p151
        %s252 = sand.u32 %s141, 1
        %s253 = scalar_lea.sflag [#allocation5], %s252
        %s254 = sand.u32 %s141, 1
        %s255 = smul.addr %s254, 16
        %s256 = scalar_lea.vmem [#allocation6], %s255
        %p257 = scmp.lt.s32.totalorder %s25, 1
        %s258 = scalar_select %p257, %s25, 1
        %p259 = scmp.lt.s32.totalorder %s26, 2
        %s260 = scalar_select %p259, %s26, 2
        %s261 = smul.addr %s260, 2
        %s262 = smul.addr %s258, 6
        %s263 = sadd.s32 %s261, %s262
        %s264 = scalar_lea.vmem %s1, %s263
        %v266 = vld [vmem:[%s224] sm:$0xff]
        %v267 = vld [vmem:[%s224 + $0x8] sm:$0xff]
        %v268 = vld [vmem:[%s224 + $0x10] sm:$0xff]
        %v269 = vld [vmem:[%s224 + $0x18] sm:$0xff]
        %v270 = vld [vmem:[%s264] sm:$0x3]
        %vm271 = vcmp.ge.f32.partialorder %v266, 0.0
        %vm272 = vcmp.ge.f32.partialorder %v267, 0.0
        %vm273 = vcmp.ge.f32.partialorder %v268, 0.0
        %vm274 = vcmp.ge.f32.partialorder %v269, 0.0
        %v275 = vmul.f32 %v266, 0.1
        %v276 = vmul.f32 %v267, 0.1
        %v277 = vmul.f32 %v268, 0.1
        %v278 = vmul.f32 %v269, 0.1
        %v279 = vsel %vm271, %v266, %v275
        %v280 = vsel %vm272, %v267, %v276
        %v281 = vsel %vm273, %v268, %v277
        %v282 = vsel %vm274, %v269, %v278
        %v284 = vlaneseq
        %v285 = vshrl.u32 %v284, 7
        %v286 = vsub.s32 0, %v285
        %v287 = vrot.slane %v270, %v286
        %v288 = vlaneseq
        %v289 = vshrl.u32 %v288, 7
        %v290 = vsub.s32 1, %v289
        %v291 = vrot.slane %v270, %v290
        %v294 = vmul.f32 %v279, %v287
        %v295 = vmul.f32 %v280, %v291
        %v296 = vmul.f32 %v281, %v287
        %v297 = vmul.f32 %v282, %v291
        %302 = vrot.lane.b32.xlu0 %v294, 3
        %v303 = vpop.permute.xlu0 %302
        %304 = vrot.lane.b32.xlu0 %v295, 3
        %v305 = vpop.permute.xlu0 %304
        %306 = vrot.lane.b32.xlu0 %v296, 3
        %v307 = vpop.permute.xlu0 %306
        %308 = vrot.lane.b32.xlu0 %v297, 3
        %v309 = vpop.permute.xlu0 %308
        %vm310 = vcmask 23552
        %v311 = vsel %vm310, %v303, %v305
        %v312 = vsel %vm310, %v307, %v309
        %vm317 = vcmask 1047576
        %318 = vst.msk [vmem:[#allocation2] sm:$0xff] %vm317, %v303
        %vm319 = vcmask 89088
        %320 = vst.msk [vmem:[#allocation2 + $0x8] sm:$0xff] %vm319, %v311
        %321 = vst.msk [vmem:[#allocation2 + $0x10] sm:$0xff] %vm317, %v307
        %322 = vst.msk [vmem:[#allocation2 + $0x18] sm:$0xff] %vm319, %v312
        %v323 = vld [vmem:[#allocation2] sm:$0xff]
        %v324 = vld [vmem:[#allocation2 + $0x8] sm:$0xff]
        %v325 = vld [vmem:[#allocation2 + $0x10] sm:$0xff]
        %v326 = vld [vmem:[#allocation2 + $0x18] sm:$0xff]
        %331 = vrot.lane.b32.xlu0 %v323, 127
        %v332 = vpop.permute.xlu0 %331
        %333 = vrot.lane.b32.xlu0 %v324, 127
        %v334 = vpop.permute.xlu0 %333
        %335 = vrot.lane.b32.xlu0 %v325, 127
        %v336 = vpop.permute.xlu0 %335
        %337 = vrot.lane.b32.xlu0 %v326, 127
        %v338 = vpop.permute.xlu0 %337
        %vm339 = vcmask 1039360
        %v340 = vsel %vm339, %v332, %v334
        %v341 = vsel %vm339, %v336, %v338
        %346 = vrot.lane.b32.xlu0 %v323, 126
        %v347 = vpop.permute.xlu0 %346
        %348 = vrot.lane.b32.xlu0 %v324, 126
        %v349 = vpop.permute.xlu0 %348
        %350 = vrot.lane.b32.xlu0 %v325, 126
        %v351 = vpop.permute.xlu0 %350
        %352 = vrot.lane.b32.xlu0 %v326, 126
        %v353 = vpop.permute.xlu0 %352
        %vm354 = vcmask 1031168
        %v355 = vsel %vm354, %v347, %v349
        %v356 = vsel %vm354, %v351, %v353
        %v361 = vpack.c.bf16 %v325, %v323
        %v362 = vpack.c.bf16 %v326, %v324
        %v363 = vpack.c.bf16 %v341, %v340
        %v364 = vpack.c.bf16 %v338, %v334
        %v365 = vpack.c.bf16 %v356, %v355
        %v366 = vpack.c.bf16 %v353, %v349
        %v367 = vld [vmem:[%s2] sm:$0xf]
        %v368 = vld [vmem:[%s2 + $0x4] sm:$0xf]
        %v369 = vld [vmem:[%s3] sm:$0xff]
        %v370 = vld [vmem:[%s3 + $0x8] sm:$0xff]
        %372 = vset.pattern.permute.xlu0 0
        %373 = vperm.xlu0 %372, %v369
        %v374 = vpop.permute.xlu0 %373
        %377 = vset.pattern.permute.xlu0 0
        %378 = vperm.xlu0 %377, %v370
        %v379 = vpop.permute.xlu0 %378
        %v383 = vunpack.c.l.b16 %v367
        %v384 = vunpack.c.l.b16 %v368
        %v385 = vpack.c.b16 %v384, %v383
        %392 = vrot.lane.b32.xlu0 %v361, 126
        %v393 = vpop.permute.xlu0 %392
        %394 = vrot.lane.b32.xlu0 %v362, 126
        %v395 = vpop.permute.xlu0 %394
        %396 = vrot.lane.b32.xlu0 %v363, 126
        %v397 = vpop.permute.xlu0 %396
        %398 = vrot.lane.b32.xlu0 %v364, 126
        %v399 = vpop.permute.xlu0 %398
        %400 = vrot.lane.b32.xlu0 %v365, 126
        %v401 = vpop.permute.xlu0 %400
        %402 = vrot.lane.b32.xlu0 %v366, 126
        %v403 = vpop.permute.xlu0 %402
        %vm404 = vcmask 1031168
        %v405 = vsel %vm404, %v393, %v395
        %v406 = vsel %vm404, %v397, %v399
        %v407 = vsel %vm404, %v401, %v403
        %vm414 = vcmask 392192
        %v416 = vsel %vm414, %v385, 0
        %418 = vmatprep.subr.bf16.mxu0 %v395
        %419 = vmatpush1.bf16.msra.mxu0 %v405
        %420 = vmatprep.subr.bf16.mxu0 %v399
        %421 = vmatpush1.bf16.msra.mxu0 %v406
        %422 = vmatprep.subr.bf16.mxu0 %v403
        %423 = vmatpush1.bf16.msra.mxu0 %v407
        %424 = vmatprep.subr.bf16.mxu0 0
        %425 = vmatpush1.bf16.msra.mxu0 0
        %426 = vmatprep.subr.bf16.mxu0 0
        %427 = vmatpush1.bf16.msra.mxu0 0
        %428 = vmatprep.subr.bf16.mxu0 0
        %429 = vmatpush1.bf16.msra.mxu0 0
        %430 = vmatprep.subr.bf16.mxu0 0
        %431 = vmatpush1.bf16.msra.mxu0 0
        %432 = vmatprep.subr.bf16.mxu0 0
        %433 = vmatpush1.bf16.msra.mxu0 0
        %434 = vmatprep.subr.bf16.mxu0 0
        %435 = vmatpush1.bf16.msra.mxu0 0
        %436 = vmatprep.subr.bf16.mxu0 0
        %437 = vmatpush1.bf16.msra.mxu0 0
        %438 = vmatprep.subr.bf16.mxu0 0
        %439 = vmatpush1.bf16.msra.mxu0 0
        %440 = vmatprep.subr.bf16.mxu0 0
        %441 = vmatpush1.bf16.msra.mxu0 0
        %442 = vmatprep.subr.bf16.mxu0 0
        %443 = vmatpush1.bf16.msra.mxu0 0
        %444 = vmatprep.subr.bf16.mxu0 0
        %445 = vmatpush1.bf16.msra.mxu0 0
        %446 = vmatprep.subr.bf16.mxu0 0
        %447 = vmatpush1.bf16.msra.mxu0 0
        %448 = vmatprep.subr.bf16.mxu0 0
        %449 = vmatpush1.bf16.msra.mxu0 0
        %450 = vmatprep.mubr.bf16.mxu0 0
        %451 = vmatmul.mubr.bf16.gmra.mrb[0].mxu0 %v416
        %v452 = vpop.f32.mrb[0].mxu0
        %v453 = vadd.f32 %v374, %v452
        %v454 = vpop.f32.mrb[0].mxu0
        %v455 = vadd.f32 %v374, %v454
        %v456 = vpop.f32.mrb[0].mxu0
        %v457 = vadd.f32 %v379, %v456
        %v458 = vpop.f32.mrb[0].mxu0
        %v459 = vadd.f32 %v379, %v458
        %460 = vdwg.mxu0
        %v461 = vadd.f32 %v453, %v266
        %v462 = vadd.f32 %v455, %v267
        %v463 = vadd.f32 %v457, %v268
        %v464 = vadd.f32 %v459, %v269
        %vm465 = vcmp.ge.f32.partialorder %v461, 0.0
        %vm466 = vcmp.ge.f32.partialorder %v462, 0.0
        %vm467 = vcmp.ge.f32.partialorder %v463, 0.0
        %vm468 = vcmp.ge.f32.partialorder %v464, 0.0
        %v469 = vmul.f32 %v461, 0.1
        %v470 = vmul.f32 %v462, 0.1
        %v471 = vmul.f32 %v463, 0.1
        %v472 = vmul.f32 %v464, 0.1
        %v473 = vsel %vm465, %v461, %v469
        %v474 = vsel %vm466, %v462, %v470
        %v475 = vsel %vm467, %v463, %v471
        %v476 = vsel %vm468, %v464, %v472
        %v477 = vmul.f32 %v473, %v287
        %v478 = vmul.f32 %v474, %v291
        %v479 = vmul.f32 %v475, %v287
        %v480 = vmul.f32 %v476, %v291
        %485 = vrot.lane.b32.xlu0 %v477, 3
        %v486 = vpop.permute.xlu0 %485
        %487 = vrot.lane.b32.xlu0 %v478, 3
        %v488 = vpop.permute.xlu0 %487
        %489 = vrot.lane.b32.xlu0 %v479, 3
        %v490 = vpop.permute.xlu0 %489
        %491 = vrot.lane.b32.xlu0 %v480, 3
        %v492 = vpop.permute.xlu0 %491
        %v493 = vsel %vm310, %v486, %v488
        %v494 = vsel %vm310, %v490, %v492
        %499 = vst.msk [vmem:[#allocation2] sm:$0xff] %vm317, %v486
        %500 = vst.msk [vmem:[#allocation2 + $0x8] sm:$0xff] %vm319, %v493
        %501 = vst.msk [vmem:[#allocation2 + $0x10] sm:$0xff] %vm317, %v490
        %502 = vst.msk [vmem:[#allocation2 + $0x18] sm:$0xff] %vm319, %v494
        %v503 = vld [vmem:[#allocation2] sm:$0xff]
        %v504 = vld [vmem:[#allocation2 + $0x8] sm:$0xff]
        %v505 = vld [vmem:[#allocation2 + $0x10] sm:$0xff]
        %v506 = vld [vmem:[#allocation2 + $0x18] sm:$0xff]
        %511 = vrot.lane.b32.xlu0 %v503, 125
        %v512 = vpop.permute.xlu0 %511
        %513 = vrot.lane.b32.xlu0 %v504, 125
        %v514 = vpop.permute.xlu0 %513
        %515 = vrot.lane.b32.xlu0 %v505, 125
        %v516 = vpop.permute.xlu0 %515
        %517 = vrot.lane.b32.xlu0 %v506, 125
        %v518 = vpop.permute.xlu0 %517
        %vm519 = vcmask 1022976
        %v520 = vsel %vm519, %v512, %v514
        %v521 = vsel %vm519, %v516, %v518
        %526 = vrot.lane.b32.xlu0 %v503, 122
        %v527 = vpop.permute.xlu0 %526
        %528 = vrot.lane.b32.xlu0 %v504, 122
        %v529 = vpop.permute.xlu0 %528
        %530 = vrot.lane.b32.xlu0 %v505, 122
        %v531 = vpop.permute.xlu0 %530
        %532 = vrot.lane.b32.xlu0 %v506, 122
        %v533 = vpop.permute.xlu0 %532
        %vm534 = vcmask 998400
        %v535 = vsel %vm534, %v527, %v529
        %v536 = vsel %vm534, %v531, %v533
        %v541 = vpack.c.bf16 %v505, %v503
        %v542 = vpack.c.bf16 %v506, %v504
        %v543 = vpack.c.bf16 %v521, %v520
        %v544 = vpack.c.bf16 %v518, %v514
        %v545 = vpack.c.bf16 %v536, %v535
        %v546 = vpack.c.bf16 %v533, %v529
        %s547 = scalar_lea.vmem %s2, 8
        %v548 = vld [vmem:[%s547] sm:$0xf]
        %v549 = vld [vmem:[%s547 + $0x4] sm:$0xf]
        %s550 = scalar_lea.vmem %s3, 16
        %v551 = vld [vmem:[%s550] sm:$0xff]
        %v552 = vld [vmem:[%s550 + $0x8] sm:$0xff]
        %554 = vset.pattern.permute.xlu0 0
        %555 = vperm.xlu0 %554, %v551
        %v556 = vpop.permute.xlu0 %555
        %559 = vset.pattern.permute.xlu0 0
        %560 = vperm.xlu0 %559, %v552
        %v561 = vpop.permute.xlu0 %560
        %v565 = vunpack.c.l.b16 %v548
        %v566 = vunpack.c.l.b16 %v549
        %v567 = vpack.c.b16 %v566, %v565
        %v569 = vsel %vm414, %v567, 0
        %571 = vmatprep.subr.bf16.mxu0 %v542
        %572 = vmatpush1.bf16.msra.mxu0 %v541
        %573 = vmatprep.subr.bf16.mxu0 %v544
        %574 = vmatpush1.bf16.msra.mxu0 %v543
        %575 = vmatprep.subr.bf16.mxu0 %v546
        %576 = vmatpush1.bf16.msra.mxu0 %v545
        %577 = vmatprep.subr.bf16.mxu0 0
        %578 = vmatpush1.bf16.msra.mxu0 0
        %579 = vmatprep.subr.bf16.mxu0 0
        %580 = vmatpush1.bf16.msra.mxu0 0
        %581 = vmatprep.subr.bf16.mxu0 0
        %582 = vmatpush1.bf16.msra.mxu0 0
        %583 = vmatprep.subr.bf16.mxu0 0
        %584 = vmatpush1.bf16.msra.mxu0 0
        %585 = vmatprep.subr.bf16.mxu0 0
        %586 = vmatpush1.bf16.msra.mxu0 0
        %587 = vmatprep.subr.bf16.mxu0 0
        %588 = vmatpush1.bf16.msra.mxu0 0
        %589 = vmatprep.subr.bf16.mxu0 0
        %590 = vmatpush1.bf16.msra.mxu0 0
        %591 = vmatprep.subr.bf16.mxu0 0
        %592 = vmatpush1.bf16.msra.mxu0 0
        %593 = vmatprep.subr.bf16.mxu0 0
        %594 = vmatpush1.bf16.msra.mxu0 0
        %595 = vmatprep.subr.bf16.mxu0 0
        %596 = vmatpush1.bf16.msra.mxu0 0
        %597 = vmatprep.subr.bf16.mxu0 0
        %598 = vmatpush1.bf16.msra.mxu0 0
        %599 = vmatprep.subr.bf16.mxu0 0
        %600 = vmatpush1.bf16.msra.mxu0 0
        %601 = vmatprep.subr.bf16.mxu0 0
        %602 = vmatpush1.bf16.msra.mxu0 0
        %603 = vmatprep.mubr.bf16.mxu0 0
        %604 = vmatmul.mubr.bf16.gmra.mrb[0].mxu0 %v569
        %v605 = vpop.f32.mrb[0].mxu0
        %v606 = vadd.f32 %v556, %v605
        %v607 = vpop.f32.mrb[0].mxu0
        %v608 = vadd.f32 %v556, %v607
        %v609 = vpop.f32.mrb[0].mxu0
        %v610 = vadd.f32 %v561, %v609
        %v611 = vpop.f32.mrb[0].mxu0
        %v612 = vadd.f32 %v561, %v611
        %613 = vdwg.mxu0
        %v614 = vadd.f32 %v606, %v461
        %v615 = vadd.f32 %v608, %v462
        %v616 = vadd.f32 %v610, %v463
        %v617 = vadd.f32 %v612, %v464
        %v618 = vmul.f32 %v614, %v287
        %v619 = vmul.f32 %v615, %v291
        %v620 = vmul.f32 %v616, %v287
        %v621 = vmul.f32 %v617, %v291
        %626 = vrot.lane.b32.xlu0 %v618, 3
        %v627 = vpop.permute.xlu0 %626
        %628 = vrot.lane.b32.xlu0 %v619, 3
        %v629 = vpop.permute.xlu0 %628
        %630 = vrot.lane.b32.xlu0 %v620, 3
        %v631 = vpop.permute.xlu0 %630
        %632 = vrot.lane.b32.xlu0 %v621, 3
        %v633 = vpop.permute.xlu0 %632
        %v634 = vsel %vm310, %v627, %v629
        %v635 = vsel %vm310, %v631, %v633
        %640 = vst.msk [vmem:[#allocation2] sm:$0xff] %vm317, %v627
        %641 = vst.msk [vmem:[#allocation2 + $0x8] sm:$0xff] %vm319, %v634
        %642 = vst.msk [vmem:[#allocation2 + $0x10] sm:$0xff] %vm317, %v631
        %643 = vst.msk [vmem:[#allocation2 + $0x18] sm:$0xff] %vm319, %v635
        %v644 = vld [vmem:[#allocation2] sm:$0xff]
        %v645 = vld [vmem:[#allocation2 + $0x8] sm:$0xff]
        %v646 = vld [vmem:[#allocation2 + $0x10] sm:$0xff]
        %v647 = vld [vmem:[#allocation2 + $0x18] sm:$0xff]
        %652 = vrot.lane.b32.xlu0 %v644, 121
        %v653 = vpop.permute.xlu0 %652
        %654 = vrot.lane.b32.xlu0 %v645, 121
        %v655 = vpop.permute.xlu0 %654
        %656 = vrot.lane.b32.xlu0 %v646, 121
        %v657 = vpop.permute.xlu0 %656
        %658 = vrot.lane.b32.xlu0 %v647, 121
        %v659 = vpop.permute.xlu0 %658
        %vm660 = vcmask 990208
        %v661 = vsel %vm660, %v653, %v655
        %v662 = vsel %vm660, %v657, %v659
        %665 = vst [vmem:[%s256] sm:$0xff] %v661
        %666 = vst [vmem:[%s256 + $0x8] sm:$0xff] %v662
        %s667 = sand.u32 %s141, 1
        %s668 = scalar_lea.sflag [#allocation5], %s667
        %s669 = sand.u32 %s141, 1
        %s670 = smul.addr %s669, 16
        %s671 = scalar_lea.vmem [#allocation6], %s670
        // Predicated region
        $region41: #{tpu_custom_call.1} parent=35 // pred_check
          %p672 = pneg %p151
        $region42: #{tpu_custom_call.1} parent=35 // pred_check_branch
          %674 = sbr.rel (%p672) target = $region44
        $region43: #{tpu_custom_call.1} parent=35 // pred_region
          %s676 = ssub.s32 256, 256
          %677 = vsyncadd %s668, %s676
          %s678 = smul.addr %s25, 6
          %s679 = sadd.s32 %s26, %s678
          %s680 = smul.addr %s679, 128
          %s681 = scalar_lea.hbm %s4, %s680
          %s682 = sshll.u32 %s671, 4
          %s683 = int_to_ptr.vmem [resolvable:$true] %s682
          %688 = dma.vmem_to_hbm [thread:$0]  %s683, 256, %s681, %s668, 128, 384, 8
        $region44: #{tpu_custom_call.1} parent=35 // pred_fallthru
          _
      $region36: #{tpu_custom_call.1} parent=5 // pred_fallthru
        _
      %p689 = scmp.le.s32.totalorder 2, %s16
      // Predicated region
      $region45: #{tpu_custom_call.1} parent=5 // pred_check
        %p690 = pneg %p689
      $region46: #{tpu_custom_call.1} parent=5 // pred_check_branch
        %692 = sbr.rel (%p690) target = $region48
      $region47: #{tpu_custom_call.1} parent=5 // pred_region
        %s693 = ssub.s32 %s16, 2
        // Predicated region
        $region49: #{tpu_custom_call.1} parent=47 // pred_check
          %p694 = pneg %p157
        $region50: #{tpu_custom_call.1} parent=47 // pred_check_branch
          %696 = sbr.rel (%p694) target = $region52
        $region51: #{tpu_custom_call.1} parent=47 // pred_region
          %s697 = sand.u32 %s142, 1
          %s698 = scalar_lea.sflag [#allocation5], %s697
          %s699 = sand.u32 %s142, 1
          %s700 = smul.addr %s699, 16
          %s701 = scalar_lea.vmem [#allocation6], %s700
          %702 = dma.done %s698, 256
        $region52: #{tpu_custom_call.1} parent=47 // pred_fallthru
          _
      $region48: #{tpu_custom_call.1} parent=5 // pred_fallthru
        _
    $region6: #{tpu_custom_call.1} parent=1 // loop_footer
      %s20 = sadd.s32 1, %s16
    $region7: #{tpu_custom_call.1} parent=1 // loop_footer_branch
      %15 = sbr.rel target = $region3
    $region8: #{tpu_custom_call.1} parent=1 // loop_exit
      _
    %703 = vsyncpa [#allocation4], 1
    %s704 = scalar_lea.sflag [#allocation4], 1
    %705 = vsyncpa %s704, 1
    %706 = vsyncpa [#allocation5], 1
    %s707 = scalar_lea.sflag [#allocation5], 1
    %708 = vsyncpa %s707, 1

</llo_original>
